<compile_context>
chip_gen: v6e
topology: v6e:2x2x1
jax: 0.10.0
libtpu: 0.0.40
codegen_flags: <defaults>
</compile_context>

<pallas_src>
import functools

import jax
import jax.numpy as jnp
from jax.experimental import pallas as pl
from jax.experimental.pallas import tpu as pltpu

_LPAD = 128   # lane-aligned start of the interior in the flat padded scratch
_RPAD = 128   # right halo (only W+1 lanes are actually needed)


def _basic_block_kernel(x_ref, w1_ref, w2_ref, s1_ref, b1_ref, s2_ref, b2_ref,
                        xmask_ref, o_ref, pad_ref, col_ref, *, H, W, C, Cout):
    # x_ref     : (1, C, H*W)          input image, channels-first, HW on lanes
    # w1_ref    : (Cout, 9*Cin)        conv1 weights, column = tap*Cin + ci
    # w2_ref    : (Cout, 9*Cout)       conv2 weights
    # s*/b*     : (C, 1)               folded BatchNorm scale / bias
    # xmask_ref : (2, H*W)             f32 masks: row0 valid for dx=-1, row1 for dx=+1
    # o_ref     : (1, Cout, H*W)
    # pad_ref   : (C, LPAD+H*W+RPAD)   flat zero-padded activation scratch
    # col_ref   : (9*C, H*W)           im2col scratch (K on sublanes, HW on lanes)
    HW = H * W

    # Zero the flat padded buffer ONCE per grid step.  The interior
    # [_LPAD, _LPAD + HW) is fully overwritten before each conv and the border
    # is never written, so this single zeroing is correct for both convs.
    pad_ref[...] = jnp.zeros_like(pad_ref)

    not_left = xmask_ref[0:1, :]     # (1, HW): 0 where x == 0     (dx = -1 taps)
    not_right = xmask_ref[1:2, :]    # (1, HW): 0 where x == W - 1 (dx = +1 taps)

    def conv3x3(h, w_ref):
        # h: (C, HW) f32  ->  (Cout, HW) f32
        pad_ref[:, _LPAD:_LPAD + HW] = h        # lane-aligned interior store
        for ky in range(3):
            for kx in range(3):
                tap = 3 * ky + kx
                start = _LPAD + (ky - 1) * W + (kx - 1)
                win = pad_ref[:, start:start + HW]      # shifted window (C, HW)
                # row-wrap guard for the x direction (y direction handled by
                # the zero halo in pad_ref)
                if kx == 0:
                    win = win * not_left
                elif kx == 2:
                    win = win * not_right
                col_ref[tap * C:(tap + 1) * C, :] = win.astype(col_ref.dtype)
        # single MXU matmul per conv: (Cout, 9*Cin) @ (9*Cin, HW)
        return jnp.dot(w_ref[...], col_ref[...],
                       preferred_element_type=jnp.float32)

    # ---- bn1 + relu (BN folded to per-channel scale/bias) ----
    x = x_ref[0].astype(jnp.float32)                        # (C, HW)
    h = jnp.maximum(x * s1_ref[...] + b1_ref[...], 0.0)

    # ---- conv1: 3x3, stride 1, padding 1 ----
    h = conv3x3(h, w1_ref)                                  # (Cout, HW)

    # ---- bn2 + relu ----
    h = jnp.maximum(h * s2_ref[...] + b2_ref[...], 0.0)

    # ---- conv2 + residual (re-read x_ref instead of keeping x live) ----
    h = conv3x3(h, w2_ref)
    o_ref[0] = (h + x_ref[0].astype(jnp.float32)).astype(o_ref.dtype)


def basic_block_forward(x_nchw, w1, w2, bn1_params, bn2_params, eps=1e-5,
                        use_bf16_matmul=False):
    """w1, w2 in PyTorch layout (Cout, Cin, 3, 3); bn params = (gamma, beta, rmean, rvar).

    TODO(synk): training-mode BatchNorm (batch statistics) and the stride>1 /
    downsample path are not implemented; BN is eval-mode folded scale/bias.
    """
    g1, be1, rm1, rv1 = bn1_params
    g2, be2, rm2, rv2 = bn2_params
    s1 = g1 / jnp.sqrt(rv1 + eps)
    b1 = be1 - rm1 * s1
    s2 = g2 / jnp.sqrt(rv2 + eps)
    b2 = be2 - rm2 * s2

    N, C, H, W = x_nchw.shape
    Cout = w1.shape[0]
    HW = H * W
    # Shared pad/col scratch and the identity residual require Cin == Cout.
    assert C == Cout and w1.shape[1] == C and w2.shape[1] == Cout
    assert W + 1 <= _LPAD and W + 1 <= _RPAD

    cdt = jnp.bfloat16 if use_bf16_matmul else jnp.float32

    # channels-first flat layout: free reshape, no NCHW<->NHWC transposes.
    x_flat = x_nchw.reshape(N, C, HW)

    # weights -> (Cout, 9*Cin), column index = (3*ky + kx)*Cin + ci
    w1_mat = jnp.transpose(w1, (0, 2, 3, 1)).reshape(Cout, 9 * C).astype(cdt)
    w2_mat = jnp.transpose(w2, (0, 2, 3, 1)).reshape(Cout, 9 * Cout).astype(cdt)

    # x-direction validity masks, precomputed outside the kernel.
    col_idx = jnp.arange(HW, dtype=jnp.int32) % W
    xmask = jnp.stack([
        (col_idx > 0).astype(jnp.float32),        # valid for dx = -1 taps
        (col_idx < (W - 1)).astype(jnp.float32),  # valid for dx = +1 taps
    ], axis=0)                                    # (2, HW)

    kernel = functools.partial(_basic_block_kernel, H=H, W=W, C=C, Cout=Cout)

    # TODO(synk): for production shapes add a row-band grid axis with a halo and
    # re-derive the band size against v7x's 64 MiB VMEM; at these shapes one
    # image per grid step fits easily and keeps the pipeline simple.
    out_flat = pl.pallas_call(
        kernel,
        out_shape=jax.ShapeDtypeStruct((N, Cout, HW), x_nchw.dtype),
        grid_spec=pltpu.PrefetchScalarGridSpec(
            num_scalar_prefetch=0,
            grid=(N,),
            in_specs=[
                pl.BlockSpec((1, C, HW), lambda n: (n, 0, 0)),
                pl.BlockSpec((Cout, 9 * C), lambda n: (0, 0)),
                pl.BlockSpec((Cout, 9 * Cout), lambda n: (0, 0)),
                pl.BlockSpec((C, 1), lambda n: (0, 0)),
                pl.BlockSpec((C, 1), lambda n: (0, 0)),
                pl.BlockSpec((Cout, 1), lambda n: (0, 0)),
                pl.BlockSpec((Cout, 1), lambda n: (0, 0)),
                pl.BlockSpec((2, HW), lambda n: (0, 0)),
            ],
            out_specs=pl.BlockSpec((1, Cout, HW), lambda n: (n, 0, 0)),
            scratch_shapes=[
                pltpu.VMEM((C, _LPAD + HW + _RPAD), jnp.float32),  # flat padded act
                pltpu.VMEM((9 * C, HW), cdt),                      # im2col buffer
            ],
        ),
        compiler_params=pltpu.CompilerParams(dimension_semantics=("parallel",)),
    )(
        x_flat, w1_mat, w2_mat,
        s1.reshape(C, 1).astype(jnp.float32),
        b1.reshape(C, 1).astype(jnp.float32),
        s2.reshape(Cout, 1).astype(jnp.float32),
        b2.reshape(Cout, 1).astype(jnp.float32),
        xmask,
    )
    return out_flat.reshape(N, Cout, H, W)


def _reference_forward(x_nchw, w1, w2, bn1_params, bn2_params, eps=1e-5):
    """Pure-JAX reference (eval-mode BN), for correctness checking."""
    g1, be1, rm1, rv1 = bn1_params
    g2, be2, rm2, rv2 = bn2_params
    s1 = g1 / jnp.sqrt(rv1 + eps)
    b1 = be1 - rm1 * s1
    s2 = g2 / jnp.sqrt(rv2 + eps)
    b2 = be2 - rm2 * s2

    x = jnp.transpose(x_nchw, (0, 2, 3, 1))
    w1_hwio = jnp.transpose(w1, (2, 3, 1, 0))
    w2_hwio = jnp.transpose(w2, (2, 3, 1, 0))
    dn = ("NHWC", "HWIO", "NHWC")

    h = jnp.maximum(x * s1 + b1, 0.0)
    h = jax.lax.conv_general_dilated(h, w1_hwio, (1, 1), "SAME", dimension_numbers=dn)
    h = jnp.maximum(h * s2 + b2, 0.0)
    h = jax.lax.conv_general_dilated(h, w2_hwio, (1, 1), "SAME", dimension_numbers=dn)
    out = h + x
    return jnp.transpose(out, (0, 3, 1, 2))


if __name__ == "__main__":
    N, C, H, W = 2, 8, 16, 16   # inplanes = planes = 8, stride = 1, downsample = None

    key = jax.random.PRNGKey(0)
    kx, kw1, kw2, kg1, kb1, km1, kv1, kg2, kb2, km2, kv2 = jax.random.split(key, 11)

    x = jax.random.normal(kx, (N, C, H, W), jnp.float32)
    w1 = jax.random.normal(kw1, (C, C, 3, 3), jnp.float32) * 0.1   # conv1 weight (Cout,Cin,3,3)
    w2 = jax.random.normal(kw2, (C, C, 3, 3), jnp.float32) * 0.1   # conv2 weight

    bn1 = (jax.random.normal(kg1, (C,)) * 0.1 + 1.0,               # gamma
           jax.random.normal(kb1, (C,)) * 0.1,                     # beta
           jax.random.normal(km1, (C,)) * 0.1,                     # running_mean
           jax.random.uniform(kv1, (C,), minval=0.5, maxval=1.5))  # running_var
    bn2 = (jax.random.normal(kg2, (C,)) * 0.1 + 1.0,
           jax.random.normal(kb2, (C,)) * 0.1,
           jax.random.normal(km2, (C,)) * 0.1,
           jax.random.uniform(kv2, (C,), minval=0.5, maxval=1.5))

    out = basic_block_forward(x, w1, w2, bn1, bn2)
    out = jax.block_until_ready(out)

    ref = jax.block_until_ready(_reference_forward(x, w1, w2, bn1, bn2))
    assert out.shape == (N, C, H, W)
    assert jnp.allclose(out, ref, atol=1e-4, rtol=1e-4), float(jnp.max(jnp.abs(out - ref)))

    print("KERNEL_OK")
</pallas_src>

<mosaic_0001>
module attributes {stable_mosaic.version = 11 : i64} {
  func.func @_basic_block_kernel(%arg0: i32, %arg1: memref<1x8x256xf32, #tpu.memory_space<vmem>>, %arg2: memref<8x72xf32, #tpu.memory_space<vmem>>, %arg3: memref<8x72xf32, #tpu.memory_space<vmem>>, %arg4: memref<8x1xf32, #tpu.memory_space<vmem>>, %arg5: memref<8x1xf32, #tpu.memory_space<vmem>>, %arg6: memref<8x1xf32, #tpu.memory_space<vmem>>, %arg7: memref<8x1xf32, #tpu.memory_space<vmem>>, %arg8: memref<2x256xf32, #tpu.memory_space<vmem>>, %arg9: memref<1x8x256xf32, #tpu.memory_space<vmem>>, %arg10: memref<8x512xf32, #tpu.memory_space<vmem>>, %arg11: memref<72x256xf32, #tpu.memory_space<vmem>>) attributes {dimension_semantics = [#tpu.dimension_semantics<parallel>], iteration_bounds = array<i64: 2>, scalar_prefetch = 0 : i64, scratch_operands = 2 : i64, tpu.core_type = #tpu.core_type<tc>, window_params = [{transform_indices = @transform_0, window_bounds = array<i64: 1, 8, 256>}, {pipeline_mode = #tpu.pipeline_mode<synchronous>, transform_indices = @transform_1, window_bounds = array<i64: 8, 72>}, {pipeline_mode = #tpu.pipeline_mode<synchronous>, transform_indices = @transform_2, window_bounds = array<i64: 8, 72>}, {pipeline_mode = #tpu.pipeline_mode<synchronous>, transform_indices = @transform_3, window_bounds = array<i64: 8, 1>}, {pipeline_mode = #tpu.pipeline_mode<synchronous>, transform_indices = @transform_4, window_bounds = array<i64: 8, 1>}, {pipeline_mode = #tpu.pipeline_mode<synchronous>, transform_indices = @transform_5, window_bounds = array<i64: 8, 1>}, {pipeline_mode = #tpu.pipeline_mode<synchronous>, transform_indices = @transform_6, window_bounds = array<i64: 8, 1>}, {pipeline_mode = #tpu.pipeline_mode<synchronous>, transform_indices = @transform_7, window_bounds = array<i64: 2, 256>}, {transform_indices = @transform_8, window_bounds = array<i64: 1, 8, 256>}]} {
    %cst = arith.constant 0.000000e+00 : f32
    %0 = vector.broadcast %cst : f32 to vector<8x512xf32>
    %c0 = arith.constant 0 : index
    %c0_0 = arith.constant 0 : index
    %1 = vector.load %arg10[%c0, %c0_0] : memref<8x512xf32, #tpu.memory_space<vmem>>, vector<8x512xf32>
    tpu.vector_store %arg10[%c0, %c0_0], %0 {strides = array<i32>} : memref<8x512xf32, #tpu.memory_space<vmem>>, vector<8x512xf32>,
    %c0_1 = arith.constant 0 : index
    %c0_2 = arith.constant 0 : index
    %2 = vector.load %arg8[%c0_1, %c0_2] : memref<2x256xf32, #tpu.memory_space<vmem>>, vector<1x256xf32>
    %c1 = arith.constant 1 : index
    %c0_3 = arith.constant 0 : index
    %3 = vector.load %arg8[%c1, %c0_3] : memref<2x256xf32, #tpu.memory_space<vmem>>, vector<1x256xf32>
    %c0_4 = arith.constant 0 : index
    %c0_5 = arith.constant 0 : index
    %c0_6 = arith.constant 0 : index
    %4 = vector.load %arg1[%c0_4, %c0_5, %c0_6] : memref<1x8x256xf32, #tpu.memory_space<vmem>>, vector<1x8x256xf32>
    %5 = vector.shape_cast %4 : vector<1x8x256xf32> to vector<8x256xf32>
    %c0_7 = arith.constant 0 : index
    %c0_8 = arith.constant 0 : index
    %6 = vector.load %arg4[%c0_7, %c0_8] : memref<8x1xf32, #tpu.memory_space<vmem>>, vector<8x1xf32>
    %7 = vector.broadcast %6 : vector<8x1xf32> to vector<8x256xf32>
    %8 = arith.mulf %5, %7 : vector<8x256xf32>
    %c0_9 = arith.constant 0 : index
    %c0_10 = arith.constant 0 : index
    %9 = vector.load %arg5[%c0_9, %c0_10] : memref<8x1xf32, #tpu.memory_space<vmem>>, vector<8x1xf32>
    %10 = vector.broadcast %9 : vector<8x1xf32> to vector<8x256xf32>
    %11 = arith.addf %8, %10 : vector<8x256xf32>
    %cst_11 = arith.constant 0.000000e+00 : f32
    %12 = vector.broadcast %cst_11 : f32 to vector<8x256xf32>
    %13 = arith.maximumf %11, %12 : vector<8x256xf32>
    %c0_12 = arith.constant 0 : index
    %c128 = arith.constant 128 : index
    %14 = vector.load %arg10[%c0_12, %c128] : memref<8x512xf32, #tpu.memory_space<vmem>>, vector<8x256xf32>
    tpu.vector_store %arg10[%c0_12, %c128], %13 {strides = array<i32>} : memref<8x512xf32, #tpu.memory_space<vmem>>, vector<8x256xf32>,
    %c0_13 = arith.constant 0 : index
    %c111 = arith.constant 111 : index
    %15 = vector.load %arg10[%c0_13, %c111] : memref<8x512xf32, #tpu.memory_space<vmem>>, vector<8x256xf32>
    %16 = vector.broadcast %2 : vector<1x256xf32> to vector<8x256xf32>
    %17 = arith.mulf %15, %16 : vector<8x256xf32>
    %c0_14 = arith.constant 0 : index
    %c0_15 = arith.constant 0 : index
    %18 = vector.load %arg11[%c0_14, %c0_15] : memref<72x256xf32, #tpu.memory_space<vmem>>, vector<8x256xf32>
    tpu.vector_store %arg11[%c0_14, %c0_15], %17 {strides = array<i32>} : memref<72x256xf32, #tpu.memory_space<vmem>>, vector<8x256xf32>,
    %c0_16 = arith.constant 0 : index
    %c112 = arith.constant 112 : index
    %19 = vector.load %arg10[%c0_16, %c112] : memref<8x512xf32, #tpu.memory_space<vmem>>, vector<8x256xf32>
    %c8 = arith.constant 8 : index
    %c0_17 = arith.constant 0 : index
    %20 = vector.load %arg11[%c8, %c0_17] : memref<72x256xf32, #tpu.memory_space<vmem>>, vector<8x256xf32>
    tpu.vector_store %arg11[%c8, %c0_17], %19 {strides = array<i32>} : memref<72x256xf32, #tpu.memory_space<vmem>>, vector<8x256xf32>,
    %c0_18 = arith.constant 0 : index
    %c113 = arith.constant 113 : index
    %21 = vector.load %arg10[%c0_18, %c113] : memref<8x512xf32, #tpu.memory_space<vmem>>, vector<8x256xf32>
    %22 = vector.broadcast %3 : vector<1x256xf32> to vector<8x256xf32>
    %23 = arith.mulf %21, %22 : vector<8x256xf32>
    %c16 = arith.constant 16 : index
    %c0_19 = arith.constant 0 : index
    %24 = vector.load %arg11[%c16, %c0_19] : memref<72x256xf32, #tpu.memory_space<vmem>>, vector<8x256xf32>
    tpu.vector_store %arg11[%c16, %c0_19], %23 {strides = array<i32>} : memref<72x256xf32, #tpu.memory_space<vmem>>, vector<8x256xf32>,
    %c0_20 = arith.constant 0 : index
    %c127 = arith.constant 127 : index
    %25 = vector.load %arg10[%c0_20, %c127] : memref<8x512xf32, #tpu.memory_space<vmem>>, vector<8x256xf32>
    %26 = vector.broadcast %2 : vector<1x256xf32> to vector<8x256xf32>
    %27 = arith.mulf %25, %26 : vector<8x256xf32>
    %c24 = arith.constant 24 : index
    %c0_21 = arith.constant 0 : index
    %28 = vector.load %arg11[%c24, %c0_21] : memref<72x256xf32, #tpu.memory_space<vmem>>, vector<8x256xf32>
    tpu.vector_store %arg11[%c24, %c0_21], %27 {strides = array<i32>} : memref<72x256xf32, #tpu.memory_space<vmem>>, vector<8x256xf32>,
    %c0_22 = arith.constant 0 : index
    %c128_23 = arith.constant 128 : index
    %29 = vector.load %arg10[%c0_22, %c128_23] : memref<8x512xf32, #tpu.memory_space<vmem>>, vector<8x256xf32>
    %c32 = arith.constant 32 : index
    %c0_24 = arith.constant 0 : index
    %30 = vector.load %arg11[%c32, %c0_24] : memref<72x256xf32, #tpu.memory_space<vmem>>, vector<8x256xf32>
    tpu.vector_store %arg11[%c32, %c0_24], %29 {strides = array<i32>} : memref<72x256xf32, #tpu.memory_space<vmem>>, vector<8x256xf32>,
    %c0_25 = arith.constant 0 : index
    %c129 = arith.constant 129 : index
    %31 = vector.load %arg10[%c0_25, %c129] : memref<8x512xf32, #tpu.memory_space<vmem>>, vector<8x256xf32>
    %32 = vector.broadcast %3 : vector<1x256xf32> to vector<8x256xf32>
    %33 = arith.mulf %31, %32 : vector<8x256xf32>
    %c40 = arith.constant 40 : index
    %c0_26 = arith.constant 0 : index
    %34 = vector.load %arg11[%c40, %c0_26] : memref<72x256xf32, #tpu.memory_space<vmem>>, vector<8x256xf32>
    tpu.vector_store %arg11[%c40, %c0_26], %33 {strides = array<i32>} : memref<72x256xf32, #tpu.memory_space<vmem>>, vector<8x256xf32>,
    %c0_27 = arith.constant 0 : index
    %c143 = arith.constant 143 : index
    %35 = vector.load %arg10[%c0_27, %c143] : memref<8x512xf32, #tpu.memory_space<vmem>>, vector<8x256xf32>
    %36 = vector.broadcast %2 : vector<1x256xf32> to vector<8x256xf32>
    %37 = arith.mulf %35, %36 : vector<8x256xf32>
    %c48 = arith.constant 48 : index
    %c0_28 = arith.constant 0 : index
    %38 = vector.load %arg11[%c48, %c0_28] : memref<72x256xf32, #tpu.memory_space<vmem>>, vector<8x256xf32>
    tpu.vector_store %arg11[%c48, %c0_28], %37 {strides = array<i32>} : memref<72x256xf32, #tpu.memory_space<vmem>>, vector<8x256xf32>,
    %c0_29 = arith.constant 0 : index
    %c144 = arith.constant 144 : index
    %39 = vector.load %arg10[%c0_29, %c144] : memref<8x512xf32, #tpu.memory_space<vmem>>, vector<8x256xf32>
    %c56 = arith.constant 56 : index
    %c0_30 = arith.constant 0 : index
    %40 = vector.load %arg11[%c56, %c0_30] : memref<72x256xf32, #tpu.memory_space<vmem>>, vector<8x256xf32>
    tpu.vector_store %arg11[%c56, %c0_30], %39 {strides = array<i32>} : memref<72x256xf32, #tpu.memory_space<vmem>>, vector<8x256xf32>,
    %c0_31 = arith.constant 0 : index
    %c145 = arith.constant 145 : index
    %41 = vector.load %arg10[%c0_31, %c145] : memref<8x512xf32, #tpu.memory_space<vmem>>, vector<8x256xf32>
    %42 = vector.broadcast %3 : vector<1x256xf32> to vector<8x256xf32>
    %43 = arith.mulf %41, %42 : vector<8x256xf32>
    %c64 = arith.constant 64 : index
    %c0_32 = arith.constant 0 : index
    %44 = vector.load %arg11[%c64, %c0_32] : memref<72x256xf32, #tpu.memory_space<vmem>>, vector<8x256xf32>
    tpu.vector_store %arg11[%c64, %c0_32], %43 {strides = array<i32>} : memref<72x256xf32, #tpu.memory_space<vmem>>, vector<8x256xf32>,
    %c0_33 = arith.constant 0 : index
    %c0_34 = arith.constant 0 : index
    %45 = vector.load %arg2[%c0_33, %c0_34] : memref<8x72xf32, #tpu.memory_space<vmem>>, vector<8x72xf32>
    %c0_35 = arith.constant 0 : index
    %c0_36 = arith.constant 0 : index
    %46 = vector.load %arg11[%c0_35, %c0_36] : memref<72x256xf32, #tpu.memory_space<vmem>>, vector<72x256xf32>
    %cst_37 = arith.constant dense<0.000000e+00> : vector<8x256xf32>
    %47 = tpu.matmul %45, %46, %cst_37 {dimension_numbers = #tpu.dot_dimension_numbers<[1], [0], [0], [1], [0, 0, 1, 1], [], []>} : vector<8x72xf32>, vector<72x256xf32>, vector<8x256xf32> -> vector<8x256xf32>
    %c0_38 = arith.constant 0 : index
    %c0_39 = arith.constant 0 : index
    %48 = vector.load %arg6[%c0_38, %c0_39] : memref<8x1xf32, #tpu.memory_space<vmem>>, vector<8x1xf32>
    %49 = vector.broadcast %48 : vector<8x1xf32> to vector<8x256xf32>
    %50 = arith.mulf %47, %49 : vector<8x256xf32>
    %c0_40 = arith.constant 0 : index
    %c0_41 = arith.constant 0 : index
    %51 = vector.load %arg7[%c0_40, %c0_41] : memref<8x1xf32, #tpu.memory_space<vmem>>, vector<8x1xf32>
    %52 = vector.broadcast %51 : vector<8x1xf32> to vector<8x256xf32>
    %53 = arith.addf %50, %52 : vector<8x256xf32>
    %cst_42 = arith.constant 0.000000e+00 : f32
    %54 = vector.broadcast %cst_42 : f32 to vector<8x256xf32>
    %55 = arith.maximumf %53, %54 : vector<8x256xf32>
    %c0_43 = arith.constant 0 : index
    %c128_44 = arith.constant 128 : index
    %56 = vector.load %arg10[%c0_43, %c128_44] : memref<8x512xf32, #tpu.memory_space<vmem>>, vector<8x256xf32>
    tpu.vector_store %arg10[%c0_43, %c128_44], %55 {strides = array<i32>} : memref<8x512xf32, #tpu.memory_space<vmem>>, vector<8x256xf32>,
    %c0_45 = arith.constant 0 : index
    %c111_46 = arith.constant 111 : index
    %57 = vector.load %arg10[%c0_45, %c111_46] : memref<8x512xf32, #tpu.memory_space<vmem>>, vector<8x256xf32>
    %58 = vector.broadcast %2 : vector<1x256xf32> to vector<8x256xf32>
    %59 = arith.mulf %57, %58 : vector<8x256xf32>
    %c0_47 = arith.constant 0 : index
    %c0_48 = arith.constant 0 : index
    %60 = vector.load %arg11[%c0_47, %c0_48] : memref<72x256xf32, #tpu.memory_space<vmem>>, vector<8x256xf32>
    tpu.vector_store %arg11[%c0_47, %c0_48], %59 {strides = array<i32>} : memref<72x256xf32, #tpu.memory_space<vmem>>, vector<8x256xf32>,
    %c0_49 = arith.constant 0 : index
    %c112_50 = arith.constant 112 : index
    %61 = vector.load %arg10[%c0_49, %c112_50] : memref<8x512xf32, #tpu.memory_space<vmem>>, vector<8x256xf32>
    %c8_51 = arith.constant 8 : index
    %c0_52 = arith.constant 0 : index
    %62 = vector.load %arg11[%c8_51, %c0_52] : memref<72x256xf32, #tpu.memory_space<vmem>>, vector<8x256xf32>
    tpu.vector_store %arg11[%c8_51, %c0_52], %61 {strides = array<i32>} : memref<72x256xf32, #tpu.memory_space<vmem>>, vector<8x256xf32>,
    %c0_53 = arith.constant 0 : index
    %c113_54 = arith.constant 113 : index
    %63 = vector.load %arg10[%c0_53, %c113_54] : memref<8x512xf32, #tpu.memory_space<vmem>>, vector<8x256xf32>
    %64 = vector.broadcast %3 : vector<1x256xf32> to vector<8x256xf32>
    %65 = arith.mulf %63, %64 : vector<8x256xf32>
    %c16_55 = arith.constant 16 : index
    %c0_56 = arith.constant 0 : index
    %66 = vector.load %arg11[%c16_55, %c0_56] : memref<72x256xf32, #tpu.memory_space<vmem>>, vector<8x256xf32>
    tpu.vector_store %arg11[%c16_55, %c0_56], %65 {strides = array<i32>} : memref<72x256xf32, #tpu.memory_space<vmem>>, vector<8x256xf32>,
    %c0_57 = arith.constant 0 : index
    %c127_58 = arith.constant 127 : index
    %67 = vector.load %arg10[%c0_57, %c127_58] : memref<8x512xf32, #tpu.memory_space<vmem>>, vector<8x256xf32>
    %68 = vector.broadcast %2 : vector<1x256xf32> to vector<8x256xf32>
    %69 = arith.mulf %67, %68 : vector<8x256xf32>
    %c24_59 = arith.constant 24 : index
    %c0_60 = arith.constant 0 : index
    %70 = vector.load %arg11[%c24_59, %c0_60] : memref<72x256xf32, #tpu.memory_space<vmem>>, vector<8x256xf32>
    tpu.vector_store %arg11[%c24_59, %c0_60], %69 {strides = array<i32>} : memref<72x256xf32, #tpu.memory_space<vmem>>, vector<8x256xf32>,
    %c0_61 = arith.constant 0 : index
    %c128_62 = arith.constant 128 : index
    %71 = vector.load %arg10[%c0_61, %c128_62] : memref<8x512xf32, #tpu.memory_space<vmem>>, vector<8x256xf32>
    %c32_63 = arith.constant 32 : index
    %c0_64 = arith.constant 0 : index
    %72 = vector.load %arg11[%c32_63, %c0_64] : memref<72x256xf32, #tpu.memory_space<vmem>>, vector<8x256xf32>
    tpu.vector_store %arg11[%c32_63, %c0_64], %71 {strides = array<i32>} : memref<72x256xf32, #tpu.memory_space<vmem>>, vector<8x256xf32>,
    %c0_65 = arith.constant 0 : index
    %c129_66 = arith.constant 129 : index
    %73 = vector.load %arg10[%c0_65, %c129_66] : memref<8x512xf32, #tpu.memory_space<vmem>>, vector<8x256xf32>
    %74 = vector.broadcast %3 : vector<1x256xf32> to vector<8x256xf32>
    %75 = arith.mulf %73, %74 : vector<8x256xf32>
    %c40_67 = arith.constant 40 : index
    %c0_68 = arith.constant 0 : index
    %76 = vector.load %arg11[%c40_67, %c0_68] : memref<72x256xf32, #tpu.memory_space<vmem>>, vector<8x256xf32>
    tpu.vector_store %arg11[%c40_67, %c0_68], %75 {strides = array<i32>} : memref<72x256xf32, #tpu.memory_space<vmem>>, vector<8x256xf32>,
    %c0_69 = arith.constant 0 : index
    %c143_70 = arith.constant 143 : index
    %77 = vector.load %arg10[%c0_69, %c143_70] : memref<8x512xf32, #tpu.memory_space<vmem>>, vector<8x256xf32>
    %78 = vector.broadcast %2 : vector<1x256xf32> to vector<8x256xf32>
    %79 = arith.mulf %77, %78 : vector<8x256xf32>
    %c48_71 = arith.constant 48 : index
    %c0_72 = arith.constant 0 : index
    %80 = vector.load %arg11[%c48_71, %c0_72] : memref<72x256xf32, #tpu.memory_space<vmem>>, vector<8x256xf32>
    tpu.vector_store %arg11[%c48_71, %c0_72], %79 {strides = array<i32>} : memref<72x256xf32, #tpu.memory_space<vmem>>, vector<8x256xf32>,
    %c0_73 = arith.constant 0 : index
    %c144_74 = arith.constant 144 : index
    %81 = vector.load %arg10[%c0_73, %c144_74] : memref<8x512xf32, #tpu.memory_space<vmem>>, vector<8x256xf32>
    %c56_75 = arith.constant 56 : index
    %c0_76 = arith.constant 0 : index
    %82 = vector.load %arg11[%c56_75, %c0_76] : memref<72x256xf32, #tpu.memory_space<vmem>>, vector<8x256xf32>
    tpu.vector_store %arg11[%c56_75, %c0_76], %81 {strides = array<i32>} : memref<72x256xf32, #tpu.memory_space<vmem>>, vector<8x256xf32>,
    %c0_77 = arith.constant 0 : index
    %c145_78 = arith.constant 145 : index
    %83 = vector.load %arg10[%c0_77, %c145_78] : memref<8x512xf32, #tpu.memory_space<vmem>>, vector<8x256xf32>
    %84 = vector.broadcast %3 : vector<1x256xf32> to vector<8x256xf32>
    %85 = arith.mulf %83, %84 : vector<8x256xf32>
    %c64_79 = arith.constant 64 : index
    %c0_80 = arith.constant 0 : index
    %86 = vector.load %arg11[%c64_79, %c0_80] : memref<72x256xf32, #tpu.memory_space<vmem>>, vector<8x256xf32>
    tpu.vector_store %arg11[%c64_79, %c0_80], %85 {strides = array<i32>} : memref<72x256xf32, #tpu.memory_space<vmem>>, vector<8x256xf32>,
    %c0_81 = arith.constant 0 : index
    %c0_82 = arith.constant 0 : index
    %87 = vector.load %arg3[%c0_81, %c0_82] : memref<8x72xf32, #tpu.memory_space<vmem>>, vector<8x72xf32>
    %c0_83 = arith.constant 0 : index
    %c0_84 = arith.constant 0 : index
    %88 = vector.load %arg11[%c0_83, %c0_84] : memref<72x256xf32, #tpu.memory_space<vmem>>, vector<72x256xf32>
    %cst_85 = arith.constant dense<0.000000e+00> : vector<8x256xf32>
    %89 = tpu.matmul %87, %88, %cst_85 {dimension_numbers = #tpu.dot_dimension_numbers<[1], [0], [0], [1], [0, 0, 1, 1], [], []>} : vector<8x72xf32>, vector<72x256xf32>, vector<8x256xf32> -> vector<8x256xf32>
    %c0_86 = arith.constant 0 : index
    %c0_87 = arith.constant 0 : index
    %c0_88 = arith.constant 0 : index
    %90 = vector.load %arg1[%c0_86, %c0_87, %c0_88] : memref<1x8x256xf32, #tpu.memory_space<vmem>>, vector<1x8x256xf32>
    %91 = vector.shape_cast %90 : vector<1x8x256xf32> to vector<8x256xf32>
    %92 = arith.addf %89, %91 : vector<8x256xf32>
    %c0_89 = arith.constant 0 : index
    %c0_90 = arith.constant 0 : index
    %c0_91 = arith.constant 0 : index
    %93 = vector.load %arg9[%c0_89, %c0_90, %c0_91] : memref<1x8x256xf32, #tpu.memory_space<vmem>>, vector<1x8x256xf32>
    %94 = vector.shape_cast %93 : vector<1x8x256xf32> to vector<8x256xf32>
    %95 = vector.shape_cast %92 : vector<8x256xf32> to vector<1x8x256xf32>
    tpu.vector_store %arg9[%c0_89, %c0_90, %c0_91], %95 {strides = array<i32>} : memref<1x8x256xf32, #tpu.memory_space<vmem>>, vector<1x8x256xf32>,
    return
  }
  func.func @transform_0(%arg0: i32) -> (i32, i32, i32) {
    %c0_i32 = arith.constant 0 : i32
    %c0_i32_0 = arith.constant 0 : i32
    %c0_i32_1 = arith.constant 0 : i32
    return %arg0, %c0_i32, %c0_i32_0 : i32, i32, i32
  }
  func.func @transform_1(%arg0: i32) -> (i32, i32) {
    %c0_i32 = arith.constant 0 : i32
    %c0_i32_0 = arith.constant 0 : i32
    %c0_i32_1 = arith.constant 0 : i32
    return %c0_i32, %c0_i32_0 : i32, i32
  }
  func.func @transform_2(%arg0: i32) -> (i32, i32) {
    %c0_i32 = arith.constant 0 : i32
    %c0_i32_0 = arith.constant 0 : i32
    %c0_i32_1 = arith.constant 0 : i32
    return %c0_i32, %c0_i32_0 : i32, i32
  }
  func.func @transform_3(%arg0: i32) -> (i32, i32) {
    %c0_i32 = arith.constant 0 : i32
    %c0_i32_0 = arith.constant 0 : i32
    %c0_i32_1 = arith.constant 0 : i32
    return %c0_i32, %c0_i32_0 : i32, i32
  }
  func.func @transform_4(%arg0: i32) -> (i32, i32) {
    %c0_i32 = arith.constant 0 : i32
    %c0_i32_0 = arith.constant 0 : i32
    %c0_i32_1 = arith.constant 0 : i32
    return %c0_i32, %c0_i32_0 : i32, i32
  }
  func.func @transform_5(%arg0: i32) -> (i32, i32) {
    %c0_i32 = arith.constant 0 : i32
    %c0_i32_0 = arith.constant 0 : i32
    %c0_i32_1 = arith.constant 0 : i32
    return %c0_i32, %c0_i32_0 : i32, i32
  }
  func.func @transform_6(%arg0: i32) -> (i32, i32) {
    %c0_i32 = arith.constant 0 : i32
    %c0_i32_0 = arith.constant 0 : i32
    %c0_i32_1 = arith.constant 0 : i32
    return %c0_i32, %c0_i32_0 : i32, i32
  }
  func.func @transform_7(%arg0: i32) -> (i32, i32) {
    %c0_i32 = arith.constant 0 : i32
    %c0_i32_0 = arith.constant 0 : i32
    %c0_i32_1 = arith.constant 0 : i32
    return %c0_i32, %c0_i32_0 : i32, i32
  }
  func.func @transform_8(%arg0: i32) -> (i32, i32, i32) {
    %c0_i32 = arith.constant 0 : i32
    %c0_i32_0 = arith.constant 0 : i32
    %c0_i32_1 = arith.constant 0 : i32
    return %arg0, %c0_i32, %c0_i32_0 : i32, i32, i32
  }
}

</mosaic_0001>

<llo_original>
// kernel: tpu_custom_call.1
$region0: #{tpu_custom_call.1}
  #allocation0 [shape = 'u32[]', space=smem, size = 0x4, offset = 0x4, fixed_abs, tag = 'smem constant byte address 0x4 - core index']
  #allocation1 [shape = 'u32[144,128]{1,0:T(1,128)}', space=vmem, size = 0x12000, scoped, tag = 'internal scratch']
  #allocation2 [shape = 'f32[8,512]{1,0:T(8,128)}', space=vmem, size = 0x4000, scoped, tag = 'scratch operand']
  #allocation3 [shape = 'f32[72,256]{1,0:T(8,128)}', space=vmem, size = 0x12000, scoped, tag = 'scratch operand']
  %s0 = inlined_call_operand.vmem [shape: f32[2,8,256], index: 0, kind: input, shape index: {}]
  %s1 = inlined_call_operand.hbm [shape: f32[8,72], index: 1, kind: input, shape index: {}]
  %s2 = inlined_call_operand.hbm [shape: f32[8,72], index: 2, kind: input, shape index: {}]
  %s3 = inlined_call_operand.vmem [shape: f32[8,1], index: 3, kind: input, shape index: {}]
  %s4 = inlined_call_operand.vmem [shape: f32[8,1], index: 4, kind: input, shape index: {}]
  %s5 = inlined_call_operand.vmem [shape: f32[8,1], index: 5, kind: input, shape index: {}]
  %s6 = inlined_call_operand.vmem [shape: f32[8,1], index: 6, kind: input, shape index: {}]
  %s7 = inlined_call_operand.vmem [shape: f32[2,256], index: 7, kind: input, shape index: {}]
  %s8 = inlined_call_operand.hbm [shape: f32[2,8,256], index: 8, kind: output, shape index: {}]
  %s9 = sld [smem:[#allocation0]]
  $region73: #{tpu_custom_call.1} parent=0
    _
  %s11 = ssub.s32 1, %s9
  %s12 = scalar_select 0, %s11, %s9
  $region1: #{tpu_custom_call.1} parent=0
    #allocation4 [shape = 'u8[4096]{0}', space=vmem, size = 0x1000, scoped, tag = 'input window, operand 1, single buffered']
    #allocation5 [shape = 's32[2]{0}', space=sflag, size = 0x8, scoped, tag = 'scoped memory for tpu_custom_call.1']
    #allocation6 [shape = 's32[2]{0}', space=sflag, size = 0x8, scoped, tag = 'scoped memory for tpu_custom_call.1']
    #allocation7 [shape = 'u8[4096]{0}', space=vmem, size = 0x1000, scoped, tag = 'input window, operand 2, single buffered']
    #allocation8 [shape = 's32[1]{0}', space=sflag, size = 0x4, scoped, tag = 'scoped memory for tpu_custom_call.1']
    #allocation9 [shape = 'u8[16384]{0}', space=vmem, size = 0x4000, scoped, tag = 'output window, operand 0']
    %13 = vsyncpa [#allocation5], 0
    %14 = vsyncpa [#allocation8], 0
    %15 = vsyncpa [#allocation6], 0
    %s16 = scalar_lea.sflag [#allocation6], 1
    %17 = vsyncpa %s16, 0
    loop: start=0, step=1, limit=4
    $region2: #{tpu_custom_call.1} parent=1 // loop_pre_header
      _
    $region3: #{tpu_custom_call.1} parent=1 // loop_header
      %s19 = sphi 0, %s23
      %p20 = scmp.ge.s32.totalorder %s19, 4
      %s29 = sphi 0, %s31
      %s32 = sphi 0, %s29
      %s33 = sphi 0, %s32
      %s49 = sphi 0, %s33
      %s53 = sphi 0, %s53
      %s55 = sphi 0, %s53
      %s56 = sphi 0, %s55
      %s70 = sphi 0, %s56
      %s74 = sphi 0, %s74
      %s76 = sphi 0, %s74
      %s77 = sphi 0, %s76
      %s91 = sphi 0, %s77
      %s95 = sphi 0, %s95
      %s97 = sphi 0, %s95
      %s98 = sphi 0, %s97
      %s112 = sphi 0, %s98
      %s116 = sphi 0, %s116
      %s118 = sphi 0, %s116
      %s119 = sphi 0, %s118
      %s133 = sphi 0, %s119
      %s137 = sphi 0, %s137
      %s139 = sphi 0, %s137
      %s140 = sphi 0, %s139
      %s154 = sphi 0, %s140
      %s158 = sphi 0, %s158
      %s160 = sphi 0, %s158
      %s161 = sphi 0, %s160
      %s175 = sphi 0, %s161
      %s179 = sphi 0, %s179
      %s181 = sphi 0, %s179
      %s182 = sphi 0, %s181
      %s196 = sphi 0, %s182
      %s202 = sphi 0, %s204
      %s205 = sphi 0, %s202
      %s206 = sphi 0, %s205
      %s222 = sphi 0, %s206
    $region4: #{tpu_custom_call.1} parent=1 // loop_header_branch
      %22 = sbr.rel (%p20) target = $region8
    $region5: #{tpu_custom_call.1} parent=1 // loop_body
      %s24 = ssub.s32 %s19, 1
      %s25 = ssub.s32 %s19, 2
      %s26 = sadd.s32 %s19, 1
      %s27 = ssub.s32 %s19, %s26
      %p28 = scmp.eq.s32.totalorder %s27, 0
      %s30 = sadd.s32 %s29, 1
      %s31 = scalar_select %p28, %s29, %s30
      %p34 = pneg %p28
      %p35 = scmp.eq.s32.totalorder %s19, 1
      %p36 = por %p34, %p35
      %p37 = scmp.ne.s32.totalorder %s29, %s32
      %p38 = scmp.eq.s32.totalorder %s19, 0
      %p39 = por %p37, %p38
      %p40 = scmp.ne.s32.totalorder %s29, %s32
      %p41 = scmp.eq.s32.totalorder %s24, 1
      %p42 = por %p40, %p41
      %p43 = scmp.ne.s32.totalorder %s32, %s33
      %p44 = scmp.eq.s32.totalorder %s24, 0
      %p45 = por %p43, %p44
      %p46 = scmp.ne.s32.totalorder %s32, %s33
      %p47 = scmp.eq.s32.totalorder %s25, 1
      %p48 = por %p46, %p47
      %p50 = scmp.ne.s32.totalorder %s33, %s49
      %p51 = scmp.eq.s32.totalorder %s25, 0
      %p52 = por %p50, %p51
      %s54 = sadd.s32 %s53, 1
      %p57 = scmp.eq.s32.totalorder %s19, 1
      %p58 = scmp.ne.s32.totalorder %s53, %s55
      %p59 = scmp.eq.s32.totalorder %s19, 0
      %p60 = por %p58, %p59
      %p61 = scmp.ne.s32.totalorder %s53, %s55
      %p62 = scmp.eq.s32.totalorder %s24, 1
      %p63 = por %p61, %p62
      %p64 = scmp.ne.s32.totalorder %s55, %s56
      %p65 = scmp.eq.s32.totalorder %s24, 0
      %p66 = por %p64, %p65
      %p67 = scmp.ne.s32.totalorder %s55, %s56
      %p68 = scmp.eq.s32.totalorder %s25, 1
      %p69 = por %p67, %p68
      %p71 = scmp.ne.s32.totalorder %s56, %s70
      %p72 = scmp.eq.s32.totalorder %s25, 0
      %p73 = por %p71, %p72
      %s75 = sadd.s32 %s74, 1
      %p78 = scmp.eq.s32.totalorder %s19, 1
      %p79 = scmp.ne.s32.totalorder %s74, %s76
      %p80 = scmp.eq.s32.totalorder %s19, 0
      %p81 = por %p79, %p80
      %p82 = scmp.ne.s32.totalorder %s74, %s76
      %p83 = scmp.eq.s32.totalorder %s24, 1
      %p84 = por %p82, %p83
      %p85 = scmp.ne.s32.totalorder %s76, %s77
      %p86 = scmp.eq.s32.totalorder %s24, 0
      %p87 = por %p85, %p86
      %p88 = scmp.ne.s32.totalorder %s76, %s77
      %p89 = scmp.eq.s32.totalorder %s25, 1
      %p90 = por %p88, %p89
      %p92 = scmp.ne.s32.totalorder %s77, %s91
      %p93 = scmp.eq.s32.totalorder %s25, 0
      %p94 = por %p92, %p93
      %s96 = sadd.s32 %s95, 1
      %p99 = scmp.eq.s32.totalorder %s19, 1
      %p100 = scmp.ne.s32.totalorder %s95, %s97
      %p101 = scmp.eq.s32.totalorder %s19, 0
      %p102 = por %p100, %p101
      %p103 = scmp.ne.s32.totalorder %s95, %s97
      %p104 = scmp.eq.s32.totalorder %s24, 1
      %p105 = por %p103, %p104
      %p106 = scmp.ne.s32.totalorder %s97, %s98
      %p107 = scmp.eq.s32.totalorder %s24, 0
      %p108 = por %p106, %p107
      %p109 = scmp.ne.s32.totalorder %s97, %s98
      %p110 = scmp.eq.s32.totalorder %s25, 1
      %p111 = por %p109, %p110
      %p113 = scmp.ne.s32.totalorder %s98, %s112
      %p114 = scmp.eq.s32.totalorder %s25, 0
      %p115 = por %p113, %p114
      %s117 = sadd.s32 %s116, 1
      %p120 = scmp.eq.s32.totalorder %s19, 1
      %p121 = scmp.ne.s32.totalorder %s116, %s118
      %p122 = scmp.eq.s32.totalorder %s19, 0
      %p123 = por %p121, %p122
      %p124 = scmp.ne.s32.totalorder %s116, %s118
      %p125 = scmp.eq.s32.totalorder %s24, 1
      %p126 = por %p124, %p125
      %p127 = scmp.ne.s32.totalorder %s118, %s119
      %p128 = scmp.eq.s32.totalorder %s24, 0
      %p129 = por %p127, %p128
      %p130 = scmp.ne.s32.totalorder %s118, %s119
      %p131 = scmp.eq.s32.totalorder %s25, 1
      %p132 = por %p130, %p131
      %p134 = scmp.ne.s32.totalorder %s119, %s133
      %p135 = scmp.eq.s32.totalorder %s25, 0
      %p136 = por %p134, %p135
      %s138 = sadd.s32 %s137, 1
      %p141 = scmp.eq.s32.totalorder %s19, 1
      %p142 = scmp.ne.s32.totalorder %s137, %s139
      %p143 = scmp.eq.s32.totalorder %s19, 0
      %p144 = por %p142, %p143
      %p145 = scmp.ne.s32.totalorder %s137, %s139
      %p146 = scmp.eq.s32.totalorder %s24, 1
      %p147 = por %p145, %p146
      %p148 = scmp.ne.s32.totalorder %s139, %s140
      %p149 = scmp.eq.s32.totalorder %s24, 0
      %p150 = por %p148, %p149
      %p151 = scmp.ne.s32.totalorder %s139, %s140
      %p152 = scmp.eq.s32.totalorder %s25, 1
      %p153 = por %p151, %p152
      %p155 = scmp.ne.s32.totalorder %s140, %s154
      %p156 = scmp.eq.s32.totalorder %s25, 0
      %p157 = por %p155, %p156
      %s159 = sadd.s32 %s158, 1
      %p162 = scmp.eq.s32.totalorder %s19, 1
      %p163 = scmp.ne.s32.totalorder %s158, %s160
      %p164 = scmp.eq.s32.totalorder %s19, 0
      %p165 = por %p163, %p164
      %p166 = scmp.ne.s32.totalorder %s158, %s160
      %p167 = scmp.eq.s32.totalorder %s24, 1
      %p168 = por %p166, %p167
      %p169 = scmp.ne.s32.totalorder %s160, %s161
      %p170 = scmp.eq.s32.totalorder %s24, 0
      %p171 = por %p169, %p170
      %p172 = scmp.ne.s32.totalorder %s160, %s161
      %p173 = scmp.eq.s32.totalorder %s25, 1
      %p174 = por %p172, %p173
      %p176 = scmp.ne.s32.totalorder %s161, %s175
      %p177 = scmp.eq.s32.totalorder %s25, 0
      %p178 = por %p176, %p177
      %s180 = sadd.s32 %s179, 1
      %p183 = scmp.eq.s32.totalorder %s19, 1
      %p184 = scmp.ne.s32.totalorder %s179, %s181
      %p185 = scmp.eq.s32.totalorder %s19, 0
      %p186 = por %p184, %p185
      %p187 = scmp.ne.s32.totalorder %s179, %s181
      %p188 = scmp.eq.s32.totalorder %s24, 1
      %p189 = por %p187, %p188
      %p190 = scmp.ne.s32.totalorder %s181, %s182
      %p191 = scmp.eq.s32.totalorder %s24, 0
      %p192 = por %p190, %p191
      %p193 = scmp.ne.s32.totalorder %s181, %s182
      %p194 = scmp.eq.s32.totalorder %s25, 1
      %p195 = por %p193, %p194
      %p197 = scmp.ne.s32.totalorder %s182, %s196
      %p198 = scmp.eq.s32.totalorder %s25, 0
      %p199 = por %p197, %p198
      %s200 = ssub.s32 %s19, %s26
      %p201 = scmp.eq.s32.totalorder %s200, 0
      %s203 = sadd.s32 %s202, 1
      %s204 = scalar_select %p201, %s202, %s203
      %p207 = pneg %p201
      %p208 = scmp.eq.s32.totalorder %s19, 1
      %p209 = por %p207, %p208
      %p210 = scmp.ne.s32.totalorder %s202, %s205
      %p211 = scmp.eq.s32.totalorder %s19, 0
      %p212 = por %p210, %p211
      %p213 = scmp.ne.s32.totalorder %s202, %s205
      %p214 = scmp.eq.s32.totalorder %s24, 1
      %p215 = por %p213, %p214
      %p216 = scmp.ne.s32.totalorder %s205, %s206
      %p217 = scmp.eq.s32.totalorder %s24, 0
      %p218 = por %p216, %p217
      %p219 = scmp.ne.s32.totalorder %s205, %s206
      %p220 = scmp.eq.s32.totalorder %s25, 1
      %p221 = por %p219, %p220
      %p223 = scmp.ne.s32.totalorder %s206, %s222
      %p224 = scmp.eq.s32.totalorder %s25, 0
      %p225 = por %p223, %p224
      %p226 = scmp.le.s32.totalorder 1, %s19
      %p227 = scmp.lt.s32.totalorder %s19, 3
      %p228 = pnand %p226, %p227
      %p229 = pneg %p228
      // Predicated region
      $region9: #{tpu_custom_call.1} parent=5 // pred_check
        _
      $region10: #{tpu_custom_call.1} parent=5 // pred_check_branch
        %231 = sbr.rel (%p228) target = $region12
      $region11: #{tpu_custom_call.1} parent=5 // pred_region
        %s232 = ssub.s32 %s19, 1
        // Predicated region
        $region13: #{tpu_custom_call.1} parent=11 // pred_check
          %p233 = pneg %p66
        $region14: #{tpu_custom_call.1} parent=11 // pred_check_branch
          %235 = sbr.rel (%p233) target = $region16
        $region15: #{tpu_custom_call.1} parent=11 // pred_region
          %s237 = ssub.s32 128, 128
          %238 = vsyncadd [#allocation5], %s237
          %s240 = sshll.u32 [#allocation4], 4
          %s241 = int_to_ptr.vmem [resolvable:$true] %s240
          %243 = dma.hbm_to_vmem [thread:$0]  %s1, 128, %s241, [#allocation5]
        $region16: #{tpu_custom_call.1} parent=11 // pred_fallthru
          _
        // Predicated region
        $region17: #{tpu_custom_call.1} parent=11 // pred_check
          %p244 = pneg %p87
        $region18: #{tpu_custom_call.1} parent=11 // pred_check_branch
          %246 = sbr.rel (%p244) target = $region20
        $region19: #{tpu_custom_call.1} parent=11 // pred_region
          %s248 = ssub.s32 128, 128
          %249 = vsyncadd [#allocation8], %s248
          %s251 = sshll.u32 [#allocation7], 4
          %s252 = int_to_ptr.vmem [resolvable:$true] %s251
          %254 = dma.hbm_to_vmem [thread:$0]  %s2, 128, %s252, [#allocation8]
        $region20: #{tpu_custom_call.1} parent=11 // pred_fallthru
          _
        // Predicated region
        $region21: #{tpu_custom_call.1} parent=11 // pred_check
          %p255 = pneg %p108
        $region22: #{tpu_custom_call.1} parent=11 // pred_check_branch
          %257 = sbr.rel (%p255) target = $region24
        $region23: #{tpu_custom_call.1} parent=11 // pred_region
          _
        $region24: #{tpu_custom_call.1} parent=11 // pred_fallthru
          _
        // Predicated region
        $region25: #{tpu_custom_call.1} parent=11 // pred_check
          %p258 = pneg %p129
        $region26: #{tpu_custom_call.1} parent=11 // pred_check_branch
          %260 = sbr.rel (%p258) target = $region28
        $region27: #{tpu_custom_call.1} parent=11 // pred_region
          _
        $region28: #{tpu_custom_call.1} parent=11 // pred_fallthru
          _
        // Predicated region
        $region29: #{tpu_custom_call.1} parent=11 // pred_check
          %p261 = pneg %p150
        $region30: #{tpu_custom_call.1} parent=11 // pred_check_branch
          %263 = sbr.rel (%p261) target = $region32
        $region31: #{tpu_custom_call.1} parent=11 // pred_region
          _
        $region32: #{tpu_custom_call.1} parent=11 // pred_fallthru
          _
        // Predicated region
        $region33: #{tpu_custom_call.1} parent=11 // pred_check
          %p264 = pneg %p171
        $region34: #{tpu_custom_call.1} parent=11 // pred_check_branch
          %266 = sbr.rel (%p264) target = $region36
        $region35: #{tpu_custom_call.1} parent=11 // pred_region
          _
        $region36: #{tpu_custom_call.1} parent=11 // pred_fallthru
          _
        // Predicated region
        $region37: #{tpu_custom_call.1} parent=11 // pred_check
          %p267 = pneg %p192
        $region38: #{tpu_custom_call.1} parent=11 // pred_check_branch
          %269 = sbr.rel (%p267) target = $region40
        $region39: #{tpu_custom_call.1} parent=11 // pred_region
          _
        $region40: #{tpu_custom_call.1} parent=11 // pred_fallthru
          _
      $region12: #{tpu_custom_call.1} parent=5 // pred_fallthru
        _
      %p270 = scmp.lt.s32.totalorder %s19, 2
      // Predicated region
      $region41: #{tpu_custom_call.1} parent=5 // pred_check
        %p271 = pneg %p270
      $region42: #{tpu_custom_call.1} parent=5 // pred_check_branch
        %273 = sbr.rel (%p271) target = $region44
      $region43: #{tpu_custom_call.1} parent=5 // pred_region
        // Predicated region
        $region45: #{tpu_custom_call.1} parent=43 // pred_check
          %p274 = pneg %p39
        $region46: #{tpu_custom_call.1} parent=43 // pred_check_branch
          %276 = sbr.rel (%p274) target = $region48
        $region47: #{tpu_custom_call.1} parent=43 // pred_region
          %p277 = scmp.lt.s32.totalorder %s19, 1
          %s278 = scalar_select %p277, %s19, 1
          %s279 = smul.addr %s278, 2
          %s280 = smul.addr %s279, 8
          %s281 = scalar_lea.vmem %s0, %s280
        $region48: #{tpu_custom_call.1} parent=43 // pred_fallthru
          _
      $region44: #{tpu_custom_call.1} parent=5 // pred_fallthru
        _
      %p282 = scmp.le.s32.totalorder 1, %s19
      %p283 = scmp.lt.s32.totalorder %s19, 3
      %p284 = pnand %p282, %p283
      %p285 = pneg %p284
      // Predicated region
      $region49: #{tpu_custom_call.1} parent=5 // pred_check
        _
      $region50: #{tpu_custom_call.1} parent=5 // pred_check_branch
        %287 = sbr.rel (%p284) target = $region52
      $region51: #{tpu_custom_call.1} parent=5 // pred_region
        %s288 = ssub.s32 %s19, 1
        // Predicated region
        $region53: #{tpu_custom_call.1} parent=51 // pred_check
          %p289 = pneg %p66
        $region54: #{tpu_custom_call.1} parent=51 // pred_check_branch
          %291 = sbr.rel (%p289) target = $region56
        $region55: #{tpu_custom_call.1} parent=51 // pred_region
          %292 = dma.done [#allocation5], 128
        $region56: #{tpu_custom_call.1} parent=51 // pred_fallthru
          _
        // Predicated region
        $region57: #{tpu_custom_call.1} parent=51 // pred_check
          %p293 = pneg %p87
        $region58: #{tpu_custom_call.1} parent=51 // pred_check_branch
          %295 = sbr.rel (%p293) target = $region60
        $region59: #{tpu_custom_call.1} parent=51 // pred_region
          %296 = dma.done [#allocation8], 128
        $region60: #{tpu_custom_call.1} parent=51 // pred_fallthru
          _
        %p297 = scmp.lt.s32.totalorder %s24, 1
        %s298 = scalar_select %p297, %s24, 1
        %s299 = smul.addr %s298, 2
        %s300 = smul.addr %s299, 8
        %s301 = scalar_lea.vmem %s0, %s300
        %p302 = pneg %p45
        %p303 = pneg %p42
        %p304 = pneg %p66
        %p305 = pneg %p63
        %p306 = pneg %p87
        %p307 = pneg %p84
        %p308 = pneg %p108
        %p309 = pneg %p105
        %p310 = pneg %p129
        %p311 = pneg %p126
        %p312 = pneg %p150
        %p313 = pneg %p147
        %p314 = pneg %p171
        %p315 = pneg %p168
        %p316 = pneg %p192
        %p317 = pneg %p189
        %p318 = pneg %p218
        %p319 = pneg %p215
        %s320 = sand.u32 %s205, 1
        %s321 = scalar_lea.sflag [#allocation6], %s320
        %s322 = sand.u32 %s205, 1
        %s323 = smul.addr %s322, 16
        %s324 = scalar_lea.vmem [#allocation9], %s323
        %p325 = scmp.lt.s32.totalorder %s24, 1
        %s326 = scalar_select %p325, %s24, 1
        %s327 = smul.addr %s326, 2
        %s328 = smul.addr %s327, 8
        %s329 = scalar_lea.vmem %s0, %s328
        %330 = vst [vmem:[#allocation2] sm:$0xff] 0.0
        %331 = vst [vmem:[#allocation2 + $0x8] sm:$0xff] 0.0
        %332 = vst [vmem:[#allocation2 + $0x10] sm:$0xff] 0.0
        %333 = vst [vmem:[#allocation2 + $0x18] sm:$0xff] 0.0
        %v334 = vld [vmem:[%s7] ss:$2 sm:$0x3]
        %s335 = scalar_lea.vmem %s7, 1
        %v336 = vld [vmem:[%s335] ss:$2 sm:$0x3]
        %v337 = vld [vmem:[%s329] sm:$0xff]
        %v338 = vld [vmem:[%s329 + $0x8] sm:$0xff]
        %v339 = vld [vmem:[%s3] sm:$0xff]
        %341 = vset.pattern.permute.xlu0 0
        %342 = vperm.xlu0 %341, %v339
        %v343 = vpop.permute.xlu0 %342
        %v345 = vmul.f32 %v337, %v343
        %v346 = vmul.f32 %v338, %v343
        %v347 = vld [vmem:[%s4] sm:$0xff]
        %349 = vset.pattern.permute.xlu0 0
        %350 = vperm.xlu0 %349, %v347
        %v351 = vpop.permute.xlu0 %350
        %v353 = vadd.f32 %v345, %v351
        %v354 = vadd.f32 %v346, %v351
        %v355 = vmax.f32 %v353, 0.0
        %v356 = vmax.f32 %v354, 0.0
        %357 = vst [vmem:[#allocation2 + $0x8] sm:$0xff] %v355
        %358 = vst [vmem:[#allocation2 + $0x10] sm:$0xff] %v356
        %v359 = vld [vmem:[#allocation2] sm:$0xff]
        %v360 = vld [vmem:[#allocation2 + $0x8] sm:$0xff]
        %v361 = vld [vmem:[#allocation2 + $0x10] sm:$0xff]
        %v363 = vlaneseq
        %v364 = vshrl.u32 %v363, 7
        %v365 = vsub.s32 0, %v364
        %v366 = vrot.slane %v334, %v365
        %v367 = vlaneseq
        %v368 = vshrl.u32 %v367, 7
        %v369 = vsub.s32 1, %v368
        %v370 = vrot.slane %v334, %v369
        %371 = vrot.lane.b32.xlu0 %v366, 111
        %v372 = vpop.permute.xlu0 %371
        %373 = vrot.lane.b32.xlu0 %v370, 111
        %v374 = vpop.permute.xlu0 %373
        %vm375 = vcmask 908288
        %v376 = vsel %vm375, %v372, %v374
        %v380 = vmul.f32 %v359, %v372
        %v381 = vmul.f32 %v360, %v376
        %v382 = vmul.f32 %v361, %v374
        %386 = vrot.lane.b32.xlu0 %v380, 17
        %v387 = vpop.permute.xlu0 %386
        %388 = vrot.lane.b32.xlu0 %v381, 17
        %v389 = vpop.permute.xlu0 %388
        %390 = vrot.lane.b32.xlu0 %v382, 17
        %v391 = vpop.permute.xlu0 %390
        %vm392 = vcmask 138240
        %v393 = vsel %vm392, %v387, %v389
        %v394 = vsel %vm392, %v389, %v391
        %397 = vst [vmem:[#allocation3] sm:$0xff] %v393
        %398 = vst [vmem:[#allocation3 + $0x8] sm:$0xff] %v394
        %v399 = vld [vmem:[#allocation2] sm:$0xff]
        %v400 = vld [vmem:[#allocation2 + $0x8] sm:$0xff]
        %v401 = vld [vmem:[#allocation2 + $0x10] sm:$0xff]
        %405 = vrot.lane.b32.xlu0 %v399, 16
        %v406 = vpop.permute.xlu0 %405
        %407 = vrot.lane.b32.xlu0 %v400, 16
        %v408 = vpop.permute.xlu0 %407
        %409 = vrot.lane.b32.xlu0 %v401, 16
        %v410 = vpop.permute.xlu0 %409
        %vm411 = vcmask 130048
        %v412 = vsel %vm411, %v406, %v408
        %v413 = vsel %vm411, %v408, %v410
        %416 = vst [vmem:[#allocation3 + $0x10] sm:$0xff] %v412
        %417 = vst [vmem:[#allocation3 + $0x18] sm:$0xff] %v413
        %v418 = vld [vmem:[#allocation2] sm:$0xff]
        %v419 = vld [vmem:[#allocation2 + $0x8] sm:$0xff]
        %v420 = vld [vmem:[#allocation2 + $0x10] sm:$0xff]
        %v422 = vlaneseq
        %v423 = vshrl.u32 %v422, 7
        %v424 = vsub.s32 0, %v423
        %v425 = vrot.slane %v336, %v424
        %v426 = vlaneseq
        %v427 = vshrl.u32 %v426, 7
        %v428 = vsub.s32 1, %v427
        %v429 = vrot.slane %v336, %v428
        %430 = vrot.lane.b32.xlu0 %v425, 113
        %v431 = vpop.permute.xlu0 %430
        %432 = vrot.lane.b32.xlu0 %v429, 113
        %v433 = vpop.permute.xlu0 %432
        %vm434 = vcmask 924672
        %v435 = vsel %vm434, %v431, %v433
        %v439 = vmul.f32 %v418, %v431
        %v440 = vmul.f32 %v419, %v435
        %v441 = vmul.f32 %v420, %v433
        %445 = vrot.lane.b32.xlu0 %v439, 15
        %v446 = vpop.permute.xlu0 %445
        %447 = vrot.lane.b32.xlu0 %v440, 15
        %v448 = vpop.permute.xlu0 %447
        %449 = vrot.lane.b32.xlu0 %v441, 15
        %v450 = vpop.permute.xlu0 %449
        %vm451 = vcmask 121856
        %v452 = vsel %vm451, %v446, %v448
        %v453 = vsel %vm451, %v448, %v450
        %456 = vst [vmem:[#allocation3 + $0x20] sm:$0xff] %v452
        %457 = vst [vmem:[#allocation3 + $0x28] sm:$0xff] %v453
        %v458 = vld [vmem:[#allocation2] sm:$0xff]
        %v459 = vld [vmem:[#allocation2 + $0x8] sm:$0xff]
        %v460 = vld [vmem:[#allocation2 + $0x10] sm:$0xff]
        %461 = vrot.lane.b32.xlu0 %v366, 127
        %v462 = vpop.permute.xlu0 %461
        %463 = vrot.lane.b32.xlu0 %v370, 127
        %v464 = vpop.permute.xlu0 %463
        %vm465 = vcmask 1039360
        %v466 = vsel %vm465, %v462, %v464
        %v470 = vmul.f32 %v458, %v462
        %v471 = vmul.f32 %v459, %v466
        %v472 = vmul.f32 %v460, %v464
        %476 = vrot.lane.b32.xlu0 %v470, 1
        %v477 = vpop.permute.xlu0 %476
        %478 = vrot.lane.b32.xlu0 %v471, 1
        %v479 = vpop.permute.xlu0 %478
        %480 = vrot.lane.b32.xlu0 %v472, 1
        %v481 = vpop.permute.xlu0 %480
        %vm482 = vcmask 7168
        %v483 = vsel %vm482, %v477, %v479
        %v484 = vsel %vm482, %v479, %v481
        %487 = vst [vmem:[#allocation3 + $0x30] sm:$0xff] %v483
        %488 = vst [vmem:[#allocation3 + $0x38] sm:$0xff] %v484
        %v489 = vld [vmem:[#allocation2 + $0x8] sm:$0xff]
        %v490 = vld [vmem:[#allocation2 + $0x10] sm:$0xff]
        %491 = vst [vmem:[#allocation3 + $0x40] sm:$0xff] %v489
        %492 = vst [vmem:[#allocation3 + $0x48] sm:$0xff] %v490
        %v493 = vld [vmem:[#allocation2 + $0x8] sm:$0xff]
        %v494 = vld [vmem:[#allocation2 + $0x10] sm:$0xff]
        %v495 = vld [vmem:[#allocation2 + $0x18] sm:$0xff]
        %496 = vrot.lane.b32.xlu0 %v425, 1
        %v497 = vpop.permute.xlu0 %496
        %498 = vrot.lane.b32.xlu0 %v429, 1
        %v499 = vpop.permute.xlu0 %498
        %v500 = vsel %vm482, %v497, %v499
        %v504 = vmul.f32 %v493, %v497
        %v505 = vmul.f32 %v494, %v500
        %v506 = vmul.f32 %v495, %v499
        %510 = vrot.lane.b32.xlu0 %v504, 127
        %v511 = vpop.permute.xlu0 %510
        %512 = vrot.lane.b32.xlu0 %v505, 127
        %v513 = vpop.permute.xlu0 %512
        %514 = vrot.lane.b32.xlu0 %v506, 127
        %v515 = vpop.permute.xlu0 %514
        %v516 = vsel %vm465, %v511, %v513
        %v517 = vsel %vm465, %v513, %v515
        %520 = vst [vmem:[#allocation3 + $0x50] sm:$0xff] %v516
        %521 = vst [vmem:[#allocation3 + $0x58] sm:$0xff] %v517
        %v522 = vld [vmem:[#allocation2 + $0x8] sm:$0xff]
        %v523 = vld [vmem:[#allocation2 + $0x10] sm:$0xff]
        %v524 = vld [vmem:[#allocation2 + $0x18] sm:$0xff]
        %525 = vrot.lane.b32.xlu0 %v366, 15
        %v526 = vpop.permute.xlu0 %525
        %527 = vrot.lane.b32.xlu0 %v370, 15
        %v528 = vpop.permute.xlu0 %527
        %v529 = vsel %vm451, %v526, %v528
        %v533 = vmul.f32 %v522, %v526
        %v534 = vmul.f32 %v523, %v529
        %v535 = vmul.f32 %v524, %v528
        %539 = vrot.lane.b32.xlu0 %v533, 113
        %v540 = vpop.permute.xlu0 %539
        %541 = vrot.lane.b32.xlu0 %v534, 113
        %v542 = vpop.permute.xlu0 %541
        %543 = vrot.lane.b32.xlu0 %v535, 113
        %v544 = vpop.permute.xlu0 %543
        %v545 = vsel %vm434, %v540, %v542
        %v546 = vsel %vm434, %v542, %v544
        %549 = vst [vmem:[#allocation3 + $0x60] sm:$0xff] %v545
        %550 = vst [vmem:[#allocation3 + $0x68] sm:$0xff] %v546
        %v551 = vld [vmem:[#allocation2 + $0x8] sm:$0xff]
        %v552 = vld [vmem:[#allocation2 + $0x10] sm:$0xff]
        %v553 = vld [vmem:[#allocation2 + $0x18] sm:$0xff]
        %557 = vrot.lane.b32.xlu0 %v551, 112
        %v558 = vpop.permute.xlu0 %557
        %559 = vrot.lane.b32.xlu0 %v552, 112
        %v560 = vpop.permute.xlu0 %559
        %561 = vrot.lane.b32.xlu0 %v553, 112
        %v562 = vpop.permute.xlu0 %561
        %vm563 = vcmask 916480
        %v564 = vsel %vm563, %v558, %v560
        %v565 = vsel %vm563, %v560, %v562
        %568 = vst [vmem:[#allocation3 + $0x70] sm:$0xff] %v564
        %569 = vst [vmem:[#allocation3 + $0x78] sm:$0xff] %v565
        %v570 = vld [vmem:[#allocation2 + $0x8] sm:$0xff]
        %v571 = vld [vmem:[#allocation2 + $0x10] sm:$0xff]
        %v572 = vld [vmem:[#allocation2 + $0x18] sm:$0xff]
        %573 = vrot.lane.b32.xlu0 %v425, 17
        %v574 = vpop.permute.xlu0 %573
        %575 = vrot.lane.b32.xlu0 %v429, 17
        %v576 = vpop.permute.xlu0 %575
        %v577 = vsel %vm392, %v574, %v576
        %v581 = vmul.f32 %v570, %v574
        %v582 = vmul.f32 %v571, %v577
        %v583 = vmul.f32 %v572, %v576
        %587 = vrot.lane.b32.xlu0 %v581, 111
        %v588 = vpop.permute.xlu0 %587
        %589 = vrot.lane.b32.xlu0 %v582, 111
        %v590 = vpop.permute.xlu0 %589
        %591 = vrot.lane.b32.xlu0 %v583, 111
        %v592 = vpop.permute.xlu0 %591
        %v593 = vsel %vm375, %v588, %v590
        %v594 = vsel %vm375, %v590, %v592
        %597 = vst [vmem:[#allocation3 + $0x80] sm:$0xff] %v593
        %598 = vst [vmem:[#allocation3 + $0x88] sm:$0xff] %v594
        %v599 = vld [vmem:[#allocation4] sm:$0xff]
        %v600 = vld [vmem:[#allocation3] sm:$0xff]
        %v601 = vld [vmem:[#allocation3 + $0x8] sm:$0xff]
        %v602 = vld [vmem:[#allocation3 + $0x10] sm:$0xff]
        %v603 = vld [vmem:[#allocation3 + $0x18] sm:$0xff]
        %v604 = vld [vmem:[#allocation3 + $0x20] sm:$0xff]
        %v605 = vld [vmem:[#allocation3 + $0x28] sm:$0xff]
        %v606 = vld [vmem:[#allocation3 + $0x30] sm:$0xff]
        %v607 = vld [vmem:[#allocation3 + $0x38] sm:$0xff]
        %v608 = vld [vmem:[#allocation3 + $0x40] sm:$0xff]
        %v609 = vld [vmem:[#allocation3 + $0x48] sm:$0xff]
        %v610 = vld [vmem:[#allocation3 + $0x50] sm:$0xff]
        %v611 = vld [vmem:[#allocation3 + $0x58] sm:$0xff]
        %v612 = vld [vmem:[#allocation3 + $0x60] sm:$0xff]
        %v613 = vld [vmem:[#allocation3 + $0x68] sm:$0xff]
        %v614 = vld [vmem:[#allocation3 + $0x70] sm:$0xff]
        %v615 = vld [vmem:[#allocation3 + $0x78] sm:$0xff]
        %v616 = vld [vmem:[#allocation3 + $0x80] sm:$0xff]
        %v617 = vld [vmem:[#allocation3 + $0x88] sm:$0xff]
        %vm618 = vcmask 588800
        %v620 = vsel %vm618, %v599, 0
        %622 = vmatprep.subr.mxu0 0.0
        %623 = vmatpush1.msra.mxu0 0.0
        %624 = vmatprep.subr.mxu0 0.0
        %625 = vmatpush1.msra.mxu0 0.0
        %626 = vmatprep.subr.mxu0 0.0
        %627 = vmatpush1.msra.mxu0 0.0
        %628 = vmatprep.subr.mxu0 0.0
        %629 = vmatpush1.msra.mxu0 0.0
        %630 = vmatprep.subr.mxu0 0.0
        %631 = vmatpush1.msra.mxu0 0.0
        %632 = vmatprep.subr.mxu0 0.0
        %633 = vmatpush1.msra.mxu0 0.0
        %634 = vmatprep.subr.mxu0 0.0
        %635 = vmatpush1.msra.mxu0 0.0
        %636 = vmatprep.subr.mxu0 %v617
        %637 = vmatpush1.msra.mxu0 %v616
        %638 = vmatprep.subr.mxu0 %v615
        %639 = vmatpush1.msra.mxu0 %v614
        %640 = vmatprep.subr.mxu0 %v613
        %641 = vmatpush1.msra.mxu0 %v612
        %642 = vmatprep.subr.mxu0 %v611
        %643 = vmatpush1.msra.mxu0 %v610
        %644 = vmatprep.subr.mxu0 %v609
        %645 = vmatpush1.msra.mxu0 %v608
        %646 = vmatprep.subr.mxu0 %v607
        %647 = vmatpush1.msra.mxu0 %v606
        %648 = vmatprep.subr.mxu0 %v605
        %649 = vmatpush1.msra.mxu0 %v604
        %650 = vmatprep.subr.mxu0 %v603
        %651 = vmatpush1.msra.mxu0 %v602
        %652 = vmatprep.subr.mxu0 %v601
        %653 = vmatpush1.msra.mxu0 %v600
        %654 = vmatprep.subr.mxu0 0.0
        %655 = vmatpush2.msra.mxu0 0.0
        %656 = vmatprep.subr.mxu0 0.0
        %657 = vmatpush2.msra.mxu0 0.0
        %658 = vmatprep.subr.mxu0 0.0
        %659 = vmatpush2.msra.mxu0 0.0
        %660 = vmatprep.subr.mxu0 0.0
        %661 = vmatpush2.msra.mxu0 0.0
        %662 = vmatprep.subr.mxu0 0.0
        %663 = vmatpush2.msra.mxu0 0.0
        %664 = vmatprep.subr.mxu0 0.0
        %665 = vmatpush2.msra.mxu0 0.0
        %666 = vmatprep.subr.mxu0 0.0
        %667 = vmatpush2.msra.mxu0 0.0
        %668 = vmatprep.subr.mxu0 0.0
        %669 = vmatpush2.msra.mxu0 0.0
        %670 = vmatprep.subr.mxu0 0.0
        %671 = vmatpush2.msra.mxu0 0.0
        %672 = vmatprep.subr.mxu0 0.0
        %673 = vmatpush2.msra.mxu0 0.0
        %674 = vmatprep.subr.mxu0 0.0
        %675 = vmatpush2.msra.mxu0 0.0
        %676 = vmatprep.subr.mxu0 0.0
        %677 = vmatpush2.msra.mxu0 0.0
        %678 = vmatprep.subr.mxu0 0.0
        %679 = vmatpush2.msra.mxu0 0.0
        %680 = vmatprep.subr.mxu0 0.0
        %681 = vmatpush2.msra.mxu0 0.0
        %682 = vmatprep.subr.mxu0 0.0
        %683 = vmatpush2.msra.mxu0 0.0
        %684 = vmatprep.subr.mxu0 0.0
        %685 = vmatpush2.msra.mxu0 0.0
        %686 = vmatprep.mubr.f32.mxu0 0.0
        %687 = vmatmul.mubr.f32.gmra.mxu0 %v620
        %v688 = vpop.f32.mrf.mxu0
        %v689 = vadd.f32 0.0, %v688
        %v690 = vpop.f32.mrf.mxu0
        %v691 = vadd.f32 0.0, %v690
        %692 = vdwg.mxu0
        %v693 = vld [vmem:[%s5] sm:$0xff]
        %695 = vset.pattern.permute.xlu0 0
        %696 = vperm.xlu0 %695, %v693
        %v697 = vpop.permute.xlu0 %696
        %v699 = vmul.f32 %v689, %v697
        %v700 = vmul.f32 %v691, %v697
        %v701 = vld [vmem:[%s6] sm:$0xff]
        %703 = vset.pattern.permute.xlu0 0
        %704 = vperm.xlu0 %703, %v701
        %v705 = vpop.permute.xlu0 %704
        %v707 = vadd.f32 %v699, %v705
        %v708 = vadd.f32 %v700, %v705
        %v709 = vmax.f32 %v707, 0.0
        %v710 = vmax.f32 %v708, 0.0
        %711 = vst [vmem:[#allocation2 + $0x8] sm:$0xff] %v709
        %712 = vst [vmem:[#allocation2 + $0x10] sm:$0xff] %v710
        %v713 = vld [vmem:[#allocation2] sm:$0xff]
        %v714 = vld [vmem:[#allocation2 + $0x8] sm:$0xff]
        %v715 = vld [vmem:[#allocation2 + $0x10] sm:$0xff]
        %v716 = vmul.f32 %v713, %v372
        %v717 = vmul.f32 %v714, %v376
        %v718 = vmul.f32 %v715, %v374
        %722 = vrot.lane.b32.xlu0 %v716, 17
        %v723 = vpop.permute.xlu0 %722
        %724 = vrot.lane.b32.xlu0 %v717, 17
        %v725 = vpop.permute.xlu0 %724
        %726 = vrot.lane.b32.xlu0 %v718, 17
        %v727 = vpop.permute.xlu0 %726
        %v728 = vsel %vm392, %v723, %v725
        %v729 = vsel %vm392, %v725, %v727
        %732 = vst [vmem:[#allocation3] sm:$0xff] %v728
        %733 = vst [vmem:[#allocation3 + $0x8] sm:$0xff] %v729
        %v734 = vld [vmem:[#allocation2] sm:$0xff]
        %v735 = vld [vmem:[#allocation2 + $0x8] sm:$0xff]
        %v736 = vld [vmem:[#allocation2 + $0x10] sm:$0xff]
        %740 = vrot.lane.b32.xlu0 %v734, 16
        %v741 = vpop.permute.xlu0 %740
        %742 = vrot.lane.b32.xlu0 %v735, 16
        %v743 = vpop.permute.xlu0 %742
        %744 = vrot.lane.b32.xlu0 %v736, 16
        %v745 = vpop.permute.xlu0 %744
        %v746 = vsel %vm411, %v741, %v743
        %v747 = vsel %vm411, %v743, %v745
        %750 = vst [vmem:[#allocation3 + $0x10] sm:$0xff] %v746
        %751 = vst [vmem:[#allocation3 + $0x18] sm:$0xff] %v747
        %v752 = vld [vmem:[#allocation2] sm:$0xff]
        %v753 = vld [vmem:[#allocation2 + $0x8] sm:$0xff]
        %v754 = vld [vmem:[#allocation2 + $0x10] sm:$0xff]
        %v755 = vmul.f32 %v752, %v431
        %v756 = vmul.f32 %v753, %v435
        %v757 = vmul.f32 %v754, %v433
        %761 = vrot.lane.b32.xlu0 %v755, 15
        %v762 = vpop.permute.xlu0 %761
        %763 = vrot.lane.b32.xlu0 %v756, 15
        %v764 = vpop.permute.xlu0 %763
        %765 = vrot.lane.b32.xlu0 %v757, 15
        %v766 = vpop.permute.xlu0 %765
        %v767 = vsel %vm451, %v762, %v764
        %v768 = vsel %vm451, %v764, %v766
        %771 = vst [vmem:[#allocation3 + $0x20] sm:$0xff] %v767
        %772 = vst [vmem:[#allocation3 + $0x28] sm:$0xff] %v768
        %v773 = vld [vmem:[#allocation2] sm:$0xff]
        %v774 = vld [vmem:[#allocation2 + $0x8] sm:$0xff]
        %v775 = vld [vmem:[#allocation2 + $0x10] sm:$0xff]
        %v776 = vmul.f32 %v773, %v462
        %v777 = vmul.f32 %v774, %v466
        %v778 = vmul.f32 %v775, %v464
        %782 = vrot.lane.b32.xlu0 %v776, 1
        %v783 = vpop.permute.xlu0 %782
        %784 = vrot.lane.b32.xlu0 %v777, 1
        %v785 = vpop.permute.xlu0 %784
        %786 = vrot.lane.b32.xlu0 %v778, 1
        %v787 = vpop.permute.xlu0 %786
        %v788 = vsel %vm482, %v783, %v785
        %v789 = vsel %vm482, %v785, %v787
        %792 = vst [vmem:[#allocation3 + $0x30] sm:$0xff] %v788
        %793 = vst [vmem:[#allocation3 + $0x38] sm:$0xff] %v789
        %v794 = vld [vmem:[#allocation2 + $0x8] sm:$0xff]
        %v795 = vld [vmem:[#allocation2 + $0x10] sm:$0xff]
        %796 = vst [vmem:[#allocation3 + $0x40] sm:$0xff] %v794
        %797 = vst [vmem:[#allocation3 + $0x48] sm:$0xff] %v795
        %v798 = vld [vmem:[#allocation2 + $0x8] sm:$0xff]
        %v799 = vld [vmem:[#allocation2 + $0x10] sm:$0xff]
        %v800 = vld [vmem:[#allocation2 + $0x18] sm:$0xff]
        %v801 = vmul.f32 %v798, %v497
        %v802 = vmul.f32 %v799, %v500
        %v803 = vmul.f32 %v800, %v499
        %807 = vrot.lane.b32.xlu0 %v801, 127
        %v808 = vpop.permute.xlu0 %807
        %809 = vrot.lane.b32.xlu0 %v802, 127
        %v810 = vpop.permute.xlu0 %809
        %811 = vrot.lane.b32.xlu0 %v803, 127
        %v812 = vpop.permute.xlu0 %811
        %v813 = vsel %vm465, %v808, %v810
        %v814 = vsel %vm465, %v810, %v812
        %817 = vst [vmem:[#allocation3 + $0x50] sm:$0xff] %v813
        %818 = vst [vmem:[#allocation3 + $0x58] sm:$0xff] %v814
        %v819 = vld [vmem:[#allocation2 + $0x8] sm:$0xff]
        %v820 = vld [vmem:[#allocation2 + $0x10] sm:$0xff]
        %v821 = vld [vmem:[#allocation2 + $0x18] sm:$0xff]
        %v822 = vmul.f32 %v819, %v526
        %v823 = vmul.f32 %v820, %v529
        %v824 = vmul.f32 %v821, %v528
        %828 = vrot.lane.b32.xlu0 %v822, 113
        %v829 = vpop.permute.xlu0 %828
        %830 = vrot.lane.b32.xlu0 %v823, 113
        %v831 = vpop.permute.xlu0 %830
        %832 = vrot.lane.b32.xlu0 %v824, 113
        %v833 = vpop.permute.xlu0 %832
        %v834 = vsel %vm434, %v829, %v831
        %v835 = vsel %vm434, %v831, %v833
        %838 = vst [vmem:[#allocation3 + $0x60] sm:$0xff] %v834
        %839 = vst [vmem:[#allocation3 + $0x68] sm:$0xff] %v835
        %v840 = vld [vmem:[#allocation2 + $0x8] sm:$0xff]
        %v841 = vld [vmem:[#allocation2 + $0x10] sm:$0xff]
        %v842 = vld [vmem:[#allocation2 + $0x18] sm:$0xff]
        %846 = vrot.lane.b32.xlu0 %v840, 112
        %v847 = vpop.permute.xlu0 %846
        %848 = vrot.lane.b32.xlu0 %v841, 112
        %v849 = vpop.permute.xlu0 %848
        %850 = vrot.lane.b32.xlu0 %v842, 112
        %v851 = vpop.permute.xlu0 %850
        %v852 = vsel %vm563, %v847, %v849
        %v853 = vsel %vm563, %v849, %v851
        %856 = vst [vmem:[#allocation3 + $0x70] sm:$0xff] %v852
        %857 = vst [vmem:[#allocation3 + $0x78] sm:$0xff] %v853
        %v858 = vld [vmem:[#allocation2 + $0x8] sm:$0xff]
        %v859 = vld [vmem:[#allocation2 + $0x10] sm:$0xff]
        %v860 = vld [vmem:[#allocation2 + $0x18] sm:$0xff]
        %v861 = vmul.f32 %v858, %v574
        %v862 = vmul.f32 %v859, %v577
        %v863 = vmul.f32 %v860, %v576
        %867 = vrot.lane.b32.xlu0 %v861, 111
        %v868 = vpop.permute.xlu0 %867
        %869 = vrot.lane.b32.xlu0 %v862, 111
        %v870 = vpop.permute.xlu0 %869
        %871 = vrot.lane.b32.xlu0 %v863, 111
        %v872 = vpop.permute.xlu0 %871
        %v873 = vsel %vm375, %v868, %v870
        %v874 = vsel %vm375, %v870, %v872
        %877 = vst [vmem:[#allocation3 + $0x80] sm:$0xff] %v873
        %878 = vst [vmem:[#allocation3 + $0x88] sm:$0xff] %v874
        %v879 = vld [vmem:[#allocation7] sm:$0xff]
        %v880 = vld [vmem:[#allocation3] sm:$0xff]
        %v881 = vld [vmem:[#allocation3 + $0x8] sm:$0xff]
        %v882 = vld [vmem:[#allocation3 + $0x10] sm:$0xff]
        %v883 = vld [vmem:[#allocation3 + $0x18] sm:$0xff]
        %v884 = vld [vmem:[#allocation3 + $0x20] sm:$0xff]
        %v885 = vld [vmem:[#allocation3 + $0x28] sm:$0xff]
        %v886 = vld [vmem:[#allocation3 + $0x30] sm:$0xff]
        %v887 = vld [vmem:[#allocation3 + $0x38] sm:$0xff]
        %v888 = vld [vmem:[#allocation3 + $0x40] sm:$0xff]
        %v889 = vld [vmem:[#allocation3 + $0x48] sm:$0xff]
        %v890 = vld [vmem:[#allocation3 + $0x50] sm:$0xff]
        %v891 = vld [vmem:[#allocation3 + $0x58] sm:$0xff]
        %v892 = vld [vmem:[#allocation3 + $0x60] sm:$0xff]
        %v893 = vld [vmem:[#allocation3 + $0x68] sm:$0xff]
        %v894 = vld [vmem:[#allocation3 + $0x70] sm:$0xff]
        %v895 = vld [vmem:[#allocation3 + $0x78] sm:$0xff]
        %v896 = vld [vmem:[#allocation3 + $0x80] sm:$0xff]
        %v897 = vld [vmem:[#allocation3 + $0x88] sm:$0xff]
        %v898 = vld [vmem:[%s329] sm:$0xff]
        %v899 = vld [vmem:[%s329 + $0x8] sm:$0xff]
        %v901 = vsel %vm618, %v879, 0
        %903 = vmatprep.subr.mxu0 0.0
        %904 = vmatpush1.msra.mxu0 0.0
        %905 = vmatprep.subr.mxu0 0.0
        %906 = vmatpush1.msra.mxu0 0.0
        %907 = vmatprep.subr.mxu0 0.0
        %908 = vmatpush1.msra.mxu0 0.0
        %909 = vmatprep.subr.mxu0 0.0
        %910 = vmatpush1.msra.mxu0 0.0
        %911 = vmatprep.subr.mxu0 0.0
        %912 = vmatpush1.msra.mxu0 0.0
        %913 = vmatprep.subr.mxu0 0.0
        %914 = vmatpush1.msra.mxu0 0.0
        %915 = vmatprep.subr.mxu0 0.0
        %916 = vmatpush1.msra.mxu0 0.0
        %917 = vmatprep.subr.mxu0 %v897
        %918 = vmatpush1.msra.mxu0 %v896
        %919 = vmatprep.subr.mxu0 %v895
        %920 = vmatpush1.msra.mxu0 %v894
        %921 = vmatprep.subr.mxu0 %v893
        %922 = vmatpush1.msra.mxu0 %v892
        %923 = vmatprep.subr.mxu0 %v891
        %924 = vmatpush1.msra.mxu0 %v890
        %925 = vmatprep.subr.mxu0 %v889
        %926 = vmatpush1.msra.mxu0 %v888
        %927 = vmatprep.subr.mxu0 %v887
        %928 = vmatpush1.msra.mxu0 %v886
        %929 = vmatprep.subr.mxu0 %v885
        %930 = vmatpush1.msra.mxu0 %v884
        %931 = vmatprep.subr.mxu0 %v883
        %932 = vmatpush1.msra.mxu0 %v882
        %933 = vmatprep.subr.mxu0 %v881
        %934 = vmatpush1.msra.mxu0 %v880
        %935 = vmatprep.subr.mxu0 0.0
        %936 = vmatpush2.msra.mxu0 0.0
        %937 = vmatprep.subr.mxu0 0.0
        %938 = vmatpush2.msra.mxu0 0.0
        %939 = vmatprep.subr.mxu0 0.0
        %940 = vmatpush2.msra.mxu0 0.0
        %941 = vmatprep.subr.mxu0 0.0
        %942 = vmatpush2.msra.mxu0 0.0
        %943 = vmatprep.subr.mxu0 0.0
        %944 = vmatpush2.msra.mxu0 0.0
        %945 = vmatprep.subr.mxu0 0.0
        %946 = vmatpush2.msra.mxu0 0.0
        %947 = vmatprep.subr.mxu0 0.0
        %948 = vmatpush2.msra.mxu0 0.0
        %949 = vmatprep.subr.mxu0 0.0
        %950 = vmatpush2.msra.mxu0 0.0
        %951 = vmatprep.subr.mxu0 0.0
        %952 = vmatpush2.msra.mxu0 0.0
        %953 = vmatprep.subr.mxu0 0.0
        %954 = vmatpush2.msra.mxu0 0.0
        %955 = vmatprep.subr.mxu0 0.0
        %956 = vmatpush2.msra.mxu0 0.0
        %957 = vmatprep.subr.mxu0 0.0
        %958 = vmatpush2.msra.mxu0 0.0
        %959 = vmatprep.subr.mxu0 0.0
        %960 = vmatpush2.msra.mxu0 0.0
        %961 = vmatprep.subr.mxu0 0.0
        %962 = vmatpush2.msra.mxu0 0.0
        %963 = vmatprep.subr.mxu0 0.0
        %964 = vmatpush2.msra.mxu0 0.0
        %965 = vmatprep.subr.mxu0 0.0
        %966 = vmatpush2.msra.mxu0 0.0
        %967 = vmatprep.mubr.f32.mxu0 0.0
        %968 = vmatmul.mubr.f32.gmra.mxu0 %v901
        %v969 = vpop.f32.mrf.mxu0
        %v970 = vadd.f32 %v898, %v969
        %v971 = vpop.f32.mrf.mxu0
        %v972 = vadd.f32 %v899, %v971
        %973 = vdwg.mxu0
        %974 = vst [vmem:[%s324] sm:$0xff] %v970
        %975 = vst [vmem:[%s324 + $0x8] sm:$0xff] %v972
        %s976 = sand.u32 %s205, 1
        %s977 = scalar_lea.sflag [#allocation6], %s976
        %s978 = sand.u32 %s205, 1
        %s979 = smul.addr %s978, 16
        %s980 = scalar_lea.vmem [#allocation9], %s979
        // Predicated region
        $region61: #{tpu_custom_call.1} parent=51 // pred_check
          %p981 = pneg %p215
        $region62: #{tpu_custom_call.1} parent=51 // pred_check_branch
          %983 = sbr.rel (%p981) target = $region64
        $region63: #{tpu_custom_call.1} parent=51 // pred_region
          %s985 = ssub.s32 256, 256
          %986 = vsyncadd %s977, %s985
          %s987 = smul.addr %s24, 2
          %s988 = smul.addr %s987, 128
          %s989 = scalar_lea.hbm %s8, %s988
          %s991 = sshll.u32 %s980, 4
          %s992 = int_to_ptr.vmem [resolvable:$true] %s991
          %994 = dma.vmem_to_hbm [thread:$0]  %s992, 256, %s989, %s977
        $region64: #{tpu_custom_call.1} parent=51 // pred_fallthru
          _
      $region52: #{tpu_custom_call.1} parent=5 // pred_fallthru
        _
      %p995 = scmp.le.s32.totalorder 2, %s19
      // Predicated region
      $region65: #{tpu_custom_call.1} parent=5 // pred_check
        %p996 = pneg %p995
      $region66: #{tpu_custom_call.1} parent=5 // pred_check_branch
        %998 = sbr.rel (%p996) target = $region68
      $region67: #{tpu_custom_call.1} parent=5 // pred_region
        %s999 = ssub.s32 %s19, 2
        // Predicated region
        $region69: #{tpu_custom_call.1} parent=67 // pred_check
          %p1000 = pneg %p221
        $region70: #{tpu_custom_call.1} parent=67 // pred_check_branch
          %1002 = sbr.rel (%p1000) target = $region72
        $region71: #{tpu_custom_call.1} parent=67 // pred_region
          %s1003 = sand.u32 %s206, 1
          %s1004 = scalar_lea.sflag [#allocation6], %s1003
          %s1005 = sand.u32 %s206, 1
          %s1006 = smul.addr %s1005, 16
          %s1007 = scalar_lea.vmem [#allocation9], %s1006
          %1008 = dma.done %s1004, 256
        $region72: #{tpu_custom_call.1} parent=67 // pred_fallthru
          _
      $region68: #{tpu_custom_call.1} parent=5 // pred_fallthru
        _
    $region6: #{tpu_custom_call.1} parent=1 // loop_footer
      %s23 = sadd.s32 1, %s19
    $region7: #{tpu_custom_call.1} parent=1 // loop_footer_branch
      %18 = sbr.rel target = $region3
    $region8: #{tpu_custom_call.1} parent=1 // loop_exit
      _
    %1009 = vsyncpa [#allocation5], 1
    %s1010 = scalar_lea.sflag [#allocation5], 1
    %1011 = vsyncpa %s1010, 1
    %1012 = vsyncpa [#allocation8], 1
    %1013 = vsyncpa [#allocation6], 1
    %s1014 = scalar_lea.sflag [#allocation6], 1
    %1015 = vsyncpa %s1014, 1

</llo_original>
